<compile_context>
chip_gen: v7x
topology: tpu7x:2x2x1
jax: 0.10.0
libtpu: 0.0.40
codegen_flags: <defaults>
</compile_context>

<pallas_src>
import jax
import jax.numpy as jnp
from jax.experimental import pallas as pl
from jax.experimental.pallas import tpu as pltpu

_LANE = 128
_SUBLANE = 8


def _identity_copy_kernel(x_ref, o_ref):
    # forward() discards the approximation expression and returns x as-is,
    # so the body is a straight VMEM tile copy.
    # TODO(synk): if upstream is ever fixed to return the approximation, pass
    # `threshold` (per-channel) as a small SMEM/VMEM operand and write
    #   x + 0.5*(sqrt((x-t)**2 + b) - sqrt((x+t)**2 + b))
    # here instead (sqrt runs on the EUP slot and hides under the DMA).
    o_ref[...] = x_ref[...]


def approx_soft_shrink_act(x, threshold, b=0.001, *, target_block_bytes=2 << 20):
    """Pallas implementation of ApproxSoftShrinkAct.forward(x, threshold).

    The module's forward returns `x` unchanged, so `threshold` and `b` do not
    influence the output and are not streamed through the kernel.
    """
    del threshold, b  # unused by the (identity) forward pass

    orig_shape = x.shape
    total = x.size
    if total == 0:
        return x

    itemsize = jnp.dtype(x.dtype).itemsize
    flat = x.reshape(-1)

    # Rare ragged case: element count not a multiple of a lane (128).  Pad the
    # flat view up to a lane multiple and slice afterwards.
    pad = (-total) % _LANE
    padded_total = total + pad
    if pad:
        flat = jnp.pad(flat, (0, pad))

    # Lane-dense column choice: the largest power-of-two multiple of 128 that
    # (a) divides the padded element count and (b) keeps even the minimum
    # (8, cols) block within the block-byte budget.  (b) guards the
    # "(8, cols) floor" without needing a second grid axis; big cols avoids
    # masked vst.msk partial stores.
    cols = _LANE
    while (padded_total % (cols * 2) == 0
           and _SUBLANE * (cols * 2) * itemsize <= target_block_bytes):
        cols *= 2
    rows = padded_total // cols
    x2 = flat.reshape(rows, cols)

    if rows < _SUBLANE:
        # Full-dim row block: always legal regardless of the (8, 128) rule,
        # and at most 8*cols*itemsize <= target_block_bytes by construction.
        row_block = rows
    else:
        row_block = max(
            _SUBLANE,
            (target_block_bytes // (cols * itemsize)) // _SUBLANE * _SUBLANE,
        )
        row_block = min(row_block, (rows // _SUBLANE) * _SUBLANE)

    num_blocks = pl.cdiv(rows, row_block)
    # Give v7x's two TensorCores something to split when everything would
    # otherwise land in a single block (no-op on 1-TC v5e/v6e).
    if num_blocks == 1 and rows >= 2 * _SUBLANE:
        row_block = ((rows // 2 + _SUBLANE - 1) // _SUBLANE) * _SUBLANE
        num_blocks = pl.cdiv(rows, row_block)

    out = pl.pallas_call(
        _identity_copy_kernel,
        out_shape=jax.ShapeDtypeStruct((rows, cols), x.dtype),
        grid=(num_blocks,),
        in_specs=[pl.BlockSpec((row_block, cols), lambda i: (i, 0))],
        out_specs=pl.BlockSpec((row_block, cols), lambda i: (i, 0)),
        compiler_params=pltpu.CompilerParams(
            dimension_semantics=("parallel",),
        ),
    )(x2)

    out_flat = out.reshape(-1)
    if pad:
        out_flat = out_flat[:total]
    return out_flat.reshape(orig_shape)


if __name__ == "__main__":
    key = jax.random.PRNGKey(0)
    kx, kt = jax.random.split(key)

    N, C, H, W = 2, 4, 16, 16
    x = jax.random.normal(kx, (N, C, H, W), dtype=jnp.float32)
    # Per-channel threshold (broadcasts over N, H, W) — deterministic init.
    threshold = jnp.linspace(0.05, 0.2, C, dtype=jnp.float32).reshape(1, C, 1, 1)

    fn = jax.jit(approx_soft_shrink_act)
    y = jax.block_until_ready(fn(x, threshold))

    # Reference: the PyTorch forward returns x unchanged.
    assert y.shape == x.shape and y.dtype == x.dtype
    assert jnp.array_equal(y, x), "mismatch vs reference semantics (output must equal input)"

    print("KERNEL_OK")
</pallas_src>

<mosaic_0001>
module attributes {stable_mosaic.version = 11 : i64} {
  func.func @_identity_copy_kernel(%arg0: i32, %arg1: memref<1x2048xf32, #tpu.memory_space<vmem>>, %arg2: memref<1x2048xf32, #tpu.memory_space<vmem>>) attributes {dimension_semantics = [#tpu.dimension_semantics<parallel>], iteration_bounds = array<i64: 1>, scalar_prefetch = 0 : i64, scratch_operands = 0 : i64, tpu.core_type = #tpu.core_type<tc>, window_params = [{transform_indices = @transform_0, window_bounds = array<i64: 1, 2048>}, {transform_indices = @transform_1, window_bounds = array<i64: 1, 2048>}]} {
    %c0 = arith.constant 0 : index
    %c0_0 = arith.constant 0 : index
    %0 = vector.load %arg1[%c0, %c0_0] : memref<1x2048xf32, #tpu.memory_space<vmem>>, vector<1x2048xf32>
    %c0_1 = arith.constant 0 : index
    %c0_2 = arith.constant 0 : index
    %1 = vector.load %arg2[%c0_1, %c0_2] : memref<1x2048xf32, #tpu.memory_space<vmem>>, vector<1x2048xf32>
    tpu.vector_store %arg2[%c0_1, %c0_2], %0 {strides = array<i32>} : memref<1x2048xf32, #tpu.memory_space<vmem>>, vector<1x2048xf32>,
    return
  }
  func.func @transform_0(%arg0: i32) -> (i32, i32) {
    %c0_i32 = arith.constant 0 : i32
    %c0_i32_0 = arith.constant 0 : i32
    return %arg0, %c0_i32 : i32, i32
  }
  func.func @transform_1(%arg0: i32) -> (i32, i32) {
    %c0_i32 = arith.constant 0 : i32
    %c0_i32_0 = arith.constant 0 : i32
    return %arg0, %c0_i32 : i32, i32
  }
}

</mosaic_0001>

<llo_original>
// kernel: approx_soft_shrink_act.1
$region0: #{approx_soft_shrink_act.1}
  #allocation0 [shape = 'u32[]', space=smem, size = 0x4, offset = 0x4, fixed_abs, tag = 'smem constant byte address 0x4 - core index']
  #allocation1 [shape = 'u32[144,128]{1,0:T(1,128)}', space=vmem, size = 0x12000, scoped, tag = 'internal scratch']
  %s0 = inlined_call_operand.vmem [shape: f32[1,2048], index: 0, kind: input, shape index: {}]
  %s1 = inlined_call_operand.vmem [shape: f32[1,2048], index: 1, kind: output, shape index: {}]
  %s2 = sld [smem:[#allocation0]]
  $region14: #{approx_soft_shrink_act.1} parent=0
    _
  %s4 = ssub.s32 1, %s2
  %s5 = scalar_select 0, %s4, %s2
  // Predicated region
  $region2: #{approx_soft_shrink_act.1} parent=0 // pred_check
    _
  $region3: #{approx_soft_shrink_act.1} parent=0 // pred_check_branch
    %7 = sbr.rel (0) target = $region5
  $region4: #{approx_soft_shrink_act.1} parent=0 // pred_region
    _
  $region5: #{approx_soft_shrink_act.1} parent=0 // pred_fallthru
    _
  %v8 = vld [vmem:[%s0] sm:$0xff]
  %v9 = vld [vmem:[%s0 + $0x8] sm:$0xff]
  %10 = vst [vmem:[%s1] sm:$0xff] %v8
  %11 = vst [vmem:[%s1 + $0x8] sm:$0xff] %v9
  // Predicated region
  $region6: #{approx_soft_shrink_act.1} parent=0 // pred_check
    _
  $region7: #{approx_soft_shrink_act.1} parent=0 // pred_check_branch
    %13 = sbr.rel (0) target = $region9
  $region8: #{approx_soft_shrink_act.1} parent=0 // pred_region
    _
  $region9: #{approx_soft_shrink_act.1} parent=0 // pred_fallthru
    _
  // Predicated region
  $region10: #{approx_soft_shrink_act.1} parent=0 // pred_check
    _
  $region11: #{approx_soft_shrink_act.1} parent=0 // pred_check_branch
    %15 = sbr.rel (0) target = $region13
  $region12: #{approx_soft_shrink_act.1} parent=0 // pred_region
    _
  $region13: #{approx_soft_shrink_act.1} parent=0 // pred_fallthru
    _

</llo_original>
